<compile_context>
chip_gen: v6e
topology: v6e:2x2x1
jax: 0.10.0
libtpu: 0.0.40
codegen_flags: <defaults>
</compile_context>

<pallas_src>
import jax
import jax.numpy as jnp
from jax.experimental import pallas as pl
from jax.experimental.pallas import tpu as pltpu

LANE = 128


def _round_up(x, m):
    return ((x + m - 1) // m) * m


# ----------------------------------------------------------------------------
# Pallas kernel: im2col conv-as-one-matmul + fused bias/mask/ReLU + max-pool + FC
# ----------------------------------------------------------------------------
def _make_textcnn_kernel(S_max, TB, E, K, Fpad, Cpad, Tpos):
    def kernel(x_ref, w_ref, bm_ref, wfc_ref, bfc_ref, out_ref):
        # x_ref:   [TB, Lp, E]   bf16  (time zero-padded to Lp = Tpos + S_max - 1)
        # w_ref:   [K, Fpad]     bf16  (stacked conv weights, K = S_max * E)
        # bm_ref:  [Tpos, Fpad]  f32   (conv bias where valid, -1e30 where not)
        # wfc_ref: [Fpad, Cpad]  bf16  (zero-padded FC weight)
        # bfc_ref: [1, Cpad]     f32
        # out_ref: [TB, Cpad]    f32   (lane-dense store; wrapper slices [:, :C])
        x = x_ref[...]                                              # bf16

        # Build the im2col slab by lane-concatenating the S_max shifted slices:
        # xcol[b, t, i*E + e] = x[b, t + i, e]   -> single K-folded MXU matmul.
        parts = [x[:, i:i + Tpos, :] for i in range(S_max)]         # static unroll
        xcol = jnp.concatenate(parts, axis=-1)                      # [TB, Tpos, K]
        xcol = xcol.reshape(TB * Tpos, K)                           # bf16, Tpos%16==0

        acc = jnp.dot(xcol, w_ref[...],
                      preferred_element_type=jnp.float32)           # [TB*Tpos, Fpad]
        acc3 = acc.reshape(TB, Tpos, Fpad)

        # Fused bias + out-of-range masking + ReLU (one broadcast add, one max).
        acc3 = jnp.maximum(acc3 + bm_ref[...], 0.0)

        pooled = jnp.max(acc3, axis=1)                              # [TB, Fpad]

        logits = jnp.dot(pooled.astype(jnp.bfloat16), wfc_ref[...],
                         preferred_element_type=jnp.float32) + bfc_ref[...]
        out_ref[...] = logits                                       # unmasked vst

    return kernel


# ----------------------------------------------------------------------------
# VMEM-aware batch-tile selection (per review: budget f32 intermediates too).
# ----------------------------------------------------------------------------
def _vmem_estimate(tb, Lp, E, Tpos, K, Fpad, Cpad):
    # Lane / sublane padded, double-buffered where the pipeline does so.
    x_tile = 2 * tb * _round_up(Lp, 16) * _round_up(E, LANE) * 2     # bf16 input tile
    im2col = 2 * tb * _round_up(Tpos, 16) * _round_up(K, LANE) * 2   # slab + slice temps
    acc = 3 * tb * Tpos * Fpad * 4                                   # f32 acc + temps
    out_t = 2 * tb * Cpad * 4
    resident = 2 * (K * Fpad * 2 + Fpad * Cpad * 2 + Tpos * Fpad * 4 + Cpad * 4)
    return x_tile + im2col + acc + out_t + resident


def _pick_batch_tile(B, Lp, E, Tpos, K, Fpad, Cpad,
                     budget_bytes=12 * 1024 * 1024, min_steps=4):
    # TB must divide B and be a multiple of 8 (or equal B) so the (TB, Cpad)
    # output block keeps (8,128) alignment.
    cands = [tb for tb in range(B, 0, -1)
             if B % tb == 0 and (tb % 8 == 0 or tb == B)]
    fitting = [tb for tb in cands
               if _vmem_estimate(tb, Lp, E, Tpos, K, Fpad, Cpad) <= budget_bytes]
    if not fitting:
        fitting = [cands[-1]]
    # Prefer the largest tile that still yields >= min_steps grid steps so both
    # v7x TensorCores get >= 2 pipelined steps; otherwise maximize step count.
    multi = [tb for tb in fitting if B // tb >= min_steps]
    return multi[0] if multi else fitting[-1]


# ----------------------------------------------------------------------------
# Wrapper
# ----------------------------------------------------------------------------
def textcnn_forward(token_ids, params, filter_sizes, *, batch_tile=None):
    """Pallas TextCNN forward. Returns (logits, lam) like the PyTorch module."""
    filter_sizes = tuple(filter_sizes)
    nS = len(filter_sizes)
    S_max = max(filter_sizes)

    # Frozen embedding gather (nn.Embedding.from_pretrained, freeze=True) kept
    # as JAX glue; table cast to bf16 so the activation stream is half-width.
    emb = params["embedding"].astype(jnp.bfloat16)
    x = emb[token_ids]                                        # [B, L, E] bf16
    B, L, E = x.shape
    assert L >= S_max, "sequence length must be >= max filter size"

    # Compute Tpos output positions per tile; round to 16 for bf16 sublane
    # alignment of the im2col reshape (extra positions are masked off).
    Tpos = _round_up(L, 16)
    Lp = Tpos + S_max - 1
    x = jnp.pad(x, ((0, 0), (0, Lp - L), (0, 0)))             # [B, Lp, E]

    Fn = params["conv_w"][0].shape[-1]
    C = params["fc_b"].shape[-1]
    K = S_max * E
    Fpad = _round_up(max(nS * Fn, LANE), LANE)                # lane-dense conv N
    Cpad = _round_up(max(C, LANE), LANE)                      # lane-dense output

    # Stacked conv weight folded along K (im2col layout) + fused bias/mask.
    w_stack = jnp.zeros((S_max, E, Fpad), jnp.float32)
    bias_mask = jnp.full((Tpos, Fpad), -1e30, jnp.float32)
    for si, s in enumerate(filter_sizes):
        c0, c1 = si * Fn, (si + 1) * Fn
        w_stack = w_stack.at[:s, :, c0:c1].set(params["conv_w"][si])
        Lv = L - s + 1                                        # valid output length
        bias_mask = bias_mask.at[:Lv, c0:c1].set(
            jnp.broadcast_to(params["conv_b"][si], (Lv, Fn)))
    w_col = w_stack.reshape(K, Fpad).astype(jnp.bfloat16)     # [K, Fpad]

    # Zero-padded, lane-dense FC weight/bias.
    wfc = jnp.zeros((Fpad, Cpad), jnp.float32)
    wfc = wfc.at[:nS * Fn, :C].set(params["fc_w"]).astype(jnp.bfloat16)
    bfc = jnp.zeros((1, Cpad), jnp.float32).at[:, :C].set(params["fc_b"])

    TB = (batch_tile if batch_tile is not None
          else _pick_batch_tile(B, Lp, E, Tpos, K, Fpad, Cpad))
    assert B % TB == 0, "batch tile must divide batch"

    kernel = _make_textcnn_kernel(S_max, TB, E, K, Fpad, Cpad, Tpos)

    out_padded = pl.pallas_call(
        kernel,
        out_shape=jax.ShapeDtypeStruct((B, Cpad), jnp.float32),
        grid=(B // TB,),
        in_specs=[
            pl.BlockSpec((TB, Lp, E), lambda b: (b, 0, 0)),        # x: batch-tiled
            pl.BlockSpec((K, Fpad), lambda b: (0, 0)),             # resident weights
            pl.BlockSpec((Tpos, Fpad), lambda b: (0, 0)),          # resident bias/mask
            pl.BlockSpec((Fpad, Cpad), lambda b: (0, 0)),
            pl.BlockSpec((1, Cpad), lambda b: (0, 0)),
        ],
        out_specs=pl.BlockSpec((TB, Cpad), lambda b: (b, 0)),
        compiler_params=pltpu.CompilerParams(
            dimension_semantics=("parallel",),                     # megacore on v7x
            vmem_limit_bytes=32 * 1024 * 1024),                    # headroom on v5e
    )(x, w_col, bias_mask, wfc, bfc)

    logits = out_padded[:, :C]
    lam = None  # eval mode: no mixup, dropout is identity
    return logits, lam


# ----------------------------------------------------------------------------
# Pure-JAX reference (mirrors the PyTorch forward, same bf16 quantization).
# ----------------------------------------------------------------------------
def textcnn_reference(token_ids, params, filter_sizes):
    hi = jax.lax.Precision.HIGHEST
    emb = params["embedding"].astype(jnp.bfloat16).astype(jnp.float32)
    x = emb[token_ids]                                        # [B, L, E]
    B, L, E = x.shape
    feats = []
    for s, w, b in zip(filter_sizes, params["conv_w"], params["conv_b"]):
        wf = w.astype(jnp.bfloat16).astype(jnp.float32)
        Lout = L - s + 1
        conv = jnp.zeros((B, Lout, w.shape[-1]), jnp.float32)
        for i in range(s):
            conv = conv + jnp.einsum("ble,ef->blf", x[:, i:i + Lout, :], wf[i],
                                     precision=hi)
        conv = jax.nn.relu(conv + b[0])
        feats.append(conv.max(axis=1))
    feat = jnp.concatenate(feats, axis=1)
    feat = feat.astype(jnp.bfloat16).astype(jnp.float32)
    wfc = params["fc_w"].astype(jnp.bfloat16).astype(jnp.float32)
    return jnp.dot(feat, wfc, precision=hi) + params["fc_b"][0]


# ----------------------------------------------------------------------------
# Deterministic parameter construction (shapes follow TextCNN.__init__).
# ----------------------------------------------------------------------------
def init_params(key, vocab_size, embed_dim, filter_sizes, filter_num, class_num):
    keys = jax.random.split(key, 3 + 2 * len(filter_sizes))
    params = {}
    # nn.Embedding.from_pretrained(args.vectors, freeze=True)
    params["embedding"] = jax.random.normal(keys[0], (vocab_size, embed_dim),
                                            jnp.float32)
    # nn.Conv2d(1, filter_num, (s, embed_dim)) -> weight [F,1,s,E], stored [s,E,F]
    params["conv_w"] = []
    params["conv_b"] = []
    for i, s in enumerate(filter_sizes):
        params["conv_w"].append(
            0.1 * jax.random.normal(keys[1 + 2 * i], (s, embed_dim, filter_num),
                                    jnp.float32))
        params["conv_b"].append(
            0.1 * jax.random.normal(keys[2 + 2 * i], (1, filter_num), jnp.float32))
    # nn.Linear(len(filter_sizes)*filter_num, class_num): stored transposed [D, C]
    D = len(filter_sizes) * filter_num
    params["fc_w"] = 0.1 * jax.random.normal(keys[-2], (D, class_num), jnp.float32)
    params["fc_b"] = 0.1 * jax.random.normal(keys[-1], (1, class_num), jnp.float32)
    return params


if __name__ == "__main__":
    # Small, module-consistent shapes (B chosen so the batch grid has >1 step).
    B, L = 16, 16                # batch, sequence length
    vocab_size = 50
    embed_dim = 32
    filter_sizes = (2, 3, 4)
    filter_num = 8
    class_num = 4

    key = jax.random.PRNGKey(0)
    k_par, k_tok = jax.random.split(key)
    params = init_params(k_par, vocab_size, embed_dim, filter_sizes,
                         filter_num, class_num)
    token_ids = jax.random.randint(k_tok, (B, L), 0, vocab_size, dtype=jnp.int32)

    logits, lam = textcnn_forward(token_ids, params, filter_sizes)
    logits = jax.block_until_ready(logits)

    ref = jax.block_until_ready(textcnn_reference(token_ids, params, filter_sizes))
    assert logits.shape == (B, class_num)
    assert lam is None
    assert jnp.allclose(logits, ref, atol=5e-3, rtol=5e-3), (logits, ref)

    print("KERNEL_OK")
</pallas_src>

<mosaic_0001>
module attributes {stable_mosaic.version = 11 : i64} {
  func.func @kernel(%arg0: i32, %arg1: memref<8x19x32xbf16, #tpu.memory_space<vmem>>, %arg2: memref<128x128xbf16, #tpu.memory_space<vmem>>, %arg3: memref<16x128xf32, #tpu.memory_space<vmem>>, %arg4: memref<128x128xbf16, #tpu.memory_space<vmem>>, %arg5: memref<1x128xf32, #tpu.memory_space<vmem>>, %arg6: memref<8x128xf32, #tpu.memory_space<vmem>>) attributes {dimension_semantics = [#tpu.dimension_semantics<parallel>], iteration_bounds = array<i64: 2>, scalar_prefetch = 0 : i64, scratch_operands = 0 : i64, tpu.core_type = #tpu.core_type<tc>, window_params = [{transform_indices = @transform_0, window_bounds = array<i64: 8, 19, 32>}, {pipeline_mode = #tpu.pipeline_mode<synchronous>, transform_indices = @transform_1, window_bounds = array<i64: 128, 128>}, {pipeline_mode = #tpu.pipeline_mode<synchronous>, transform_indices = @transform_2, window_bounds = array<i64: 16, 128>}, {pipeline_mode = #tpu.pipeline_mode<synchronous>, transform_indices = @transform_3, window_bounds = array<i64: 128, 128>}, {pipeline_mode = #tpu.pipeline_mode<synchronous>, transform_indices = @transform_4, window_bounds = array<i64: 1, 128>}, {transform_indices = @transform_5, window_bounds = array<i64: 8, 128>}]} {
    %c0 = arith.constant 0 : index
    %c0_0 = arith.constant 0 : index
    %c0_1 = arith.constant 0 : index
    %0 = vector.load %arg1[%c0, %c0_0, %c0_1] : memref<8x19x32xbf16, #tpu.memory_space<vmem>>, vector<8x19x32xbf16>
    %1 = vector.extract_strided_slice %0 {offsets = [0, 0, 0], sizes = [8, 16, 32], strides = [1, 1, 1]} : vector<8x19x32xbf16> to vector<8x16x32xbf16>
    %2 = vector.extract_strided_slice %0 {offsets = [0, 1, 0], sizes = [8, 16, 32], strides = [1, 1, 1]} : vector<8x19x32xbf16> to vector<8x16x32xbf16>
    %3 = vector.extract_strided_slice %0 {offsets = [0, 2, 0], sizes = [8, 16, 32], strides = [1, 1, 1]} : vector<8x19x32xbf16> to vector<8x16x32xbf16>
    %4 = vector.extract_strided_slice %0 {offsets = [0, 3, 0], sizes = [8, 16, 32], strides = [1, 1, 1]} : vector<8x19x32xbf16> to vector<8x16x32xbf16>
    %5 = tpu.concatenate %1, %2, %3, %4 in 2 : vector<8x16x32xbf16>, vector<8x16x32xbf16>, vector<8x16x32xbf16>, vector<8x16x32xbf16> -> vector<8x16x128xbf16>
    %6 = vector.shape_cast %5 : vector<8x16x128xbf16> to vector<128x128xbf16>
    %c0_2 = arith.constant 0 : index
    %c0_3 = arith.constant 0 : index
    %7 = vector.load %arg2[%c0_2, %c0_3] : memref<128x128xbf16, #tpu.memory_space<vmem>>, vector<128x128xbf16>
    %cst = arith.constant dense<0.000000e+00> : vector<128x128xf32>
    %8 = tpu.matmul %6, %7, %cst {dimension_numbers = #tpu.dot_dimension_numbers<[1], [0], [0], [1], [0, 0, 1, 1], [], []>} : vector<128x128xbf16>, vector<128x128xbf16>, vector<128x128xf32> -> vector<128x128xf32>
    %9 = vector.shape_cast %8 : vector<128x128xf32> to vector<8x16x128xf32>
    %c0_4 = arith.constant 0 : index
    %c0_5 = arith.constant 0 : index
    %10 = vector.load %arg3[%c0_4, %c0_5] : memref<16x128xf32, #tpu.memory_space<vmem>>, vector<16x128xf32>
    %11 = vector.shape_cast %10 : vector<16x128xf32> to vector<1x16x128xf32>
    %12 = vector.broadcast %11 : vector<1x16x128xf32> to vector<8x16x128xf32>
    %13 = arith.addf %9, %12 : vector<8x16x128xf32>
    %cst_6 = arith.constant 0.000000e+00 : f32
    %14 = vector.broadcast %cst_6 : f32 to vector<8x16x128xf32>
    %15 = arith.maximumf %13, %14 : vector<8x16x128xf32>
    %cst_7 = arith.constant dense<0xFF800000> : vector<8x128xf32>
    %16 = vector.multi_reduction <maximumf>, %15, %cst_7 [1] : vector<8x16x128xf32> to vector<8x128xf32>
    %17 = arith.truncf %16 : vector<8x128xf32> to vector<8x128xbf16>
    %c0_8 = arith.constant 0 : index
    %c0_9 = arith.constant 0 : index
    %18 = vector.load %arg4[%c0_8, %c0_9] : memref<128x128xbf16, #tpu.memory_space<vmem>>, vector<128x128xbf16>
    %cst_10 = arith.constant dense<0.000000e+00> : vector<8x128xf32>
    %19 = tpu.matmul %17, %18, %cst_10 {dimension_numbers = #tpu.dot_dimension_numbers<[1], [0], [0], [1], [0, 0, 1, 1], [], []>} : vector<8x128xbf16>, vector<128x128xbf16>, vector<8x128xf32> -> vector<8x128xf32>
    %c0_11 = arith.constant 0 : index
    %c0_12 = arith.constant 0 : index
    %20 = vector.load %arg5[%c0_11, %c0_12] : memref<1x128xf32, #tpu.memory_space<vmem>>, vector<1x128xf32>
    %21 = vector.broadcast %20 : vector<1x128xf32> to vector<8x128xf32>
    %22 = arith.addf %19, %21 : vector<8x128xf32>
    %c0_13 = arith.constant 0 : index
    %c0_14 = arith.constant 0 : index
    %23 = vector.load %arg6[%c0_13, %c0_14] : memref<8x128xf32, #tpu.memory_space<vmem>>, vector<8x128xf32>
    tpu.vector_store %arg6[%c0_13, %c0_14], %22 {strides = array<i32>} : memref<8x128xf32, #tpu.memory_space<vmem>>, vector<8x128xf32>,
    return
  }
  func.func @transform_0(%arg0: i32) -> (i32, i32, i32) {
    %c0_i32 = arith.constant 0 : i32
    %c0_i32_0 = arith.constant 0 : i32
    %c0_i32_1 = arith.constant 0 : i32
    return %arg0, %c0_i32, %c0_i32_0 : i32, i32, i32
  }
  func.func @transform_1(%arg0: i32) -> (i32, i32) {
    %c0_i32 = arith.constant 0 : i32
    %c0_i32_0 = arith.constant 0 : i32
    %c0_i32_1 = arith.constant 0 : i32
    return %c0_i32, %c0_i32_0 : i32, i32
  }
  func.func @transform_2(%arg0: i32) -> (i32, i32) {
    %c0_i32 = arith.constant 0 : i32
    %c0_i32_0 = arith.constant 0 : i32
    %c0_i32_1 = arith.constant 0 : i32
    return %c0_i32, %c0_i32_0 : i32, i32
  }
  func.func @transform_3(%arg0: i32) -> (i32, i32) {
    %c0_i32 = arith.constant 0 : i32
    %c0_i32_0 = arith.constant 0 : i32
    %c0_i32_1 = arith.constant 0 : i32
    return %c0_i32, %c0_i32_0 : i32, i32
  }
  func.func @transform_4(%arg0: i32) -> (i32, i32) {
    %c0_i32 = arith.constant 0 : i32
    %c0_i32_0 = arith.constant 0 : i32
    %c0_i32_1 = arith.constant 0 : i32
    return %c0_i32, %c0_i32_0 : i32, i32
  }
  func.func @transform_5(%arg0: i32) -> (i32, i32) {
    %c0_i32 = arith.constant 0 : i32
    %c0_i32_0 = arith.constant 0 : i32
    return %arg0, %c0_i32 : i32, i32
  }
}

</mosaic_0001>

<llo_original>
// kernel: tpu_custom_call.1
$region0: #{tpu_custom_call.1}
  #allocation0 [shape = 'u32[]', space=smem, size = 0x4, offset = 0x4, fixed_abs, tag = 'smem constant byte address 0x4 - core index']
  #allocation1 [shape = 'u32[144,128]{1,0:T(1,128)}', space=vmem, size = 0x12000, scoped, tag = 'internal scratch']
  %s0 = inlined_call_operand.vmem [shape: bf16[16,19,32], index: 0, kind: input, shape index: {}]
  %s1 = inlined_call_operand.vmem [shape: bf16[128,128], index: 1, kind: input, shape index: {}]
  %s2 = inlined_call_operand.vmem [shape: f32[16,128], index: 2, kind: input, shape index: {}]
  %s3 = inlined_call_operand.vmem [shape: bf16[128,128], index: 3, kind: input, shape index: {}]
  %s4 = inlined_call_operand.vmem [shape: f32[1,128], index: 4, kind: input, shape index: {}]
  %s5 = inlined_call_operand.hbm [shape: f32[16,128], index: 5, kind: output, shape index: {}]
  %s6 = sld [smem:[#allocation0]]
  $region53: #{tpu_custom_call.1} parent=0
    _
  %s8 = ssub.s32 1, %s6
  %s9 = scalar_select 0, %s8, %s6
  $region1: #{tpu_custom_call.1} parent=0
    #allocation2 [shape = 'u8[8192]{0}', space=vmem, size = 0x2000, scoped, tag = 'output window, operand 0']
    #allocation3 [shape = 's32[2]{0}', space=sflag, size = 0x8, scoped, tag = 'scoped memory for tpu_custom_call.1']
    %10 = vsyncpa [#allocation3], 0
    %s11 = scalar_lea.sflag [#allocation3], 1
    %12 = vsyncpa %s11, 0
    loop: start=0, step=1, limit=4
    $region2: #{tpu_custom_call.1} parent=1 // loop_pre_header
      _
    $region3: #{tpu_custom_call.1} parent=1 // loop_header
      %s14 = sphi 0, %s18
      %p15 = scmp.ge.s32.totalorder %s14, 4
      %s24 = sphi 0, %s26
      %s27 = sphi 0, %s24
      %s28 = sphi 0, %s27
      %s44 = sphi 0, %s28
      %s48 = sphi 0, %s48
      %s50 = sphi 0, %s48
      %s51 = sphi 0, %s50
      %s65 = sphi 0, %s51
      %s69 = sphi 0, %s69
      %s71 = sphi 0, %s69
      %s72 = sphi 0, %s71
      %s86 = sphi 0, %s72
      %s90 = sphi 0, %s90
      %s92 = sphi 0, %s90
      %s93 = sphi 0, %s92
      %s107 = sphi 0, %s93
      %s111 = sphi 0, %s111
      %s113 = sphi 0, %s111
      %s114 = sphi 0, %s113
      %s128 = sphi 0, %s114
      %s134 = sphi 0, %s136
      %s137 = sphi 0, %s134
      %s138 = sphi 0, %s137
      %s154 = sphi 0, %s138
    $region4: #{tpu_custom_call.1} parent=1 // loop_header_branch
      %17 = sbr.rel (%p15) target = $region8
    $region5: #{tpu_custom_call.1} parent=1 // loop_body
      %s19 = ssub.s32 %s14, 1
      %s20 = ssub.s32 %s14, 2
      %s21 = sadd.s32 %s14, 1
      %s22 = ssub.s32 %s14, %s21
      %p23 = scmp.eq.s32.totalorder %s22, 0
      %s25 = sadd.s32 %s24, 1
      %s26 = scalar_select %p23, %s24, %s25
      %p29 = pneg %p23
      %p30 = scmp.eq.s32.totalorder %s14, 1
      %p31 = por %p29, %p30
      %p32 = scmp.ne.s32.totalorder %s24, %s27
      %p33 = scmp.eq.s32.totalorder %s14, 0
      %p34 = por %p32, %p33
      %p35 = scmp.ne.s32.totalorder %s24, %s27
      %p36 = scmp.eq.s32.totalorder %s19, 1
      %p37 = por %p35, %p36
      %p38 = scmp.ne.s32.totalorder %s27, %s28
      %p39 = scmp.eq.s32.totalorder %s19, 0
      %p40 = por %p38, %p39
      %p41 = scmp.ne.s32.totalorder %s27, %s28
      %p42 = scmp.eq.s32.totalorder %s20, 1
      %p43 = por %p41, %p42
      %p45 = scmp.ne.s32.totalorder %s28, %s44
      %p46 = scmp.eq.s32.totalorder %s20, 0
      %p47 = por %p45, %p46
      %s49 = sadd.s32 %s48, 1
      %p52 = scmp.eq.s32.totalorder %s14, 1
      %p53 = scmp.ne.s32.totalorder %s48, %s50
      %p54 = scmp.eq.s32.totalorder %s14, 0
      %p55 = por %p53, %p54
      %p56 = scmp.ne.s32.totalorder %s48, %s50
      %p57 = scmp.eq.s32.totalorder %s19, 1
      %p58 = por %p56, %p57
      %p59 = scmp.ne.s32.totalorder %s50, %s51
      %p60 = scmp.eq.s32.totalorder %s19, 0
      %p61 = por %p59, %p60
      %p62 = scmp.ne.s32.totalorder %s50, %s51
      %p63 = scmp.eq.s32.totalorder %s20, 1
      %p64 = por %p62, %p63
      %p66 = scmp.ne.s32.totalorder %s51, %s65
      %p67 = scmp.eq.s32.totalorder %s20, 0
      %p68 = por %p66, %p67
      %s70 = sadd.s32 %s69, 1
      %p73 = scmp.eq.s32.totalorder %s14, 1
      %p74 = scmp.ne.s32.totalorder %s69, %s71
      %p75 = scmp.eq.s32.totalorder %s14, 0
      %p76 = por %p74, %p75
      %p77 = scmp.ne.s32.totalorder %s69, %s71
      %p78 = scmp.eq.s32.totalorder %s19, 1
      %p79 = por %p77, %p78
      %p80 = scmp.ne.s32.totalorder %s71, %s72
      %p81 = scmp.eq.s32.totalorder %s19, 0
      %p82 = por %p80, %p81
      %p83 = scmp.ne.s32.totalorder %s71, %s72
      %p84 = scmp.eq.s32.totalorder %s20, 1
      %p85 = por %p83, %p84
      %p87 = scmp.ne.s32.totalorder %s72, %s86
      %p88 = scmp.eq.s32.totalorder %s20, 0
      %p89 = por %p87, %p88
      %s91 = sadd.s32 %s90, 1
      %p94 = scmp.eq.s32.totalorder %s14, 1
      %p95 = scmp.ne.s32.totalorder %s90, %s92
      %p96 = scmp.eq.s32.totalorder %s14, 0
      %p97 = por %p95, %p96
      %p98 = scmp.ne.s32.totalorder %s90, %s92
      %p99 = scmp.eq.s32.totalorder %s19, 1
      %p100 = por %p98, %p99
      %p101 = scmp.ne.s32.totalorder %s92, %s93
      %p102 = scmp.eq.s32.totalorder %s19, 0
      %p103 = por %p101, %p102
      %p104 = scmp.ne.s32.totalorder %s92, %s93
      %p105 = scmp.eq.s32.totalorder %s20, 1
      %p106 = por %p104, %p105
      %p108 = scmp.ne.s32.totalorder %s93, %s107
      %p109 = scmp.eq.s32.totalorder %s20, 0
      %p110 = por %p108, %p109
      %s112 = sadd.s32 %s111, 1
      %p115 = scmp.eq.s32.totalorder %s14, 1
      %p116 = scmp.ne.s32.totalorder %s111, %s113
      %p117 = scmp.eq.s32.totalorder %s14, 0
      %p118 = por %p116, %p117
      %p119 = scmp.ne.s32.totalorder %s111, %s113
      %p120 = scmp.eq.s32.totalorder %s19, 1
      %p121 = por %p119, %p120
      %p122 = scmp.ne.s32.totalorder %s113, %s114
      %p123 = scmp.eq.s32.totalorder %s19, 0
      %p124 = por %p122, %p123
      %p125 = scmp.ne.s32.totalorder %s113, %s114
      %p126 = scmp.eq.s32.totalorder %s20, 1
      %p127 = por %p125, %p126
      %p129 = scmp.ne.s32.totalorder %s114, %s128
      %p130 = scmp.eq.s32.totalorder %s20, 0
      %p131 = por %p129, %p130
      %s132 = ssub.s32 %s14, %s21
      %p133 = scmp.eq.s32.totalorder %s132, 0
      %s135 = sadd.s32 %s134, 1
      %s136 = scalar_select %p133, %s134, %s135
      %p139 = pneg %p133
      %p140 = scmp.eq.s32.totalorder %s14, 1
      %p141 = por %p139, %p140
      %p142 = scmp.ne.s32.totalorder %s134, %s137
      %p143 = scmp.eq.s32.totalorder %s14, 0
      %p144 = por %p142, %p143
      %p145 = scmp.ne.s32.totalorder %s134, %s137
      %p146 = scmp.eq.s32.totalorder %s19, 1
      %p147 = por %p145, %p146
      %p148 = scmp.ne.s32.totalorder %s137, %s138
      %p149 = scmp.eq.s32.totalorder %s19, 0
      %p150 = por %p148, %p149
      %p151 = scmp.ne.s32.totalorder %s137, %s138
      %p152 = scmp.eq.s32.totalorder %s20, 1
      %p153 = por %p151, %p152
      %p155 = scmp.ne.s32.totalorder %s138, %s154
      %p156 = scmp.eq.s32.totalorder %s20, 0
      %p157 = por %p155, %p156
      %p158 = scmp.le.s32.totalorder 1, %s14
      %p159 = scmp.lt.s32.totalorder %s14, 3
      %p160 = pnand %p158, %p159
      %p161 = pneg %p160
      // Predicated region
      $region9: #{tpu_custom_call.1} parent=5 // pred_check
        _
      $region10: #{tpu_custom_call.1} parent=5 // pred_check_branch
        %163 = sbr.rel (%p160) target = $region12
      $region11: #{tpu_custom_call.1} parent=5 // pred_region
        %s164 = ssub.s32 %s14, 1
        // Predicated region
        $region13: #{tpu_custom_call.1} parent=11 // pred_check
          %p165 = pneg %p61
        $region14: #{tpu_custom_call.1} parent=11 // pred_check_branch
          %167 = sbr.rel (%p165) target = $region16
        $region15: #{tpu_custom_call.1} parent=11 // pred_region
          _
        $region16: #{tpu_custom_call.1} parent=11 // pred_fallthru
          _
        // Predicated region
        $region17: #{tpu_custom_call.1} parent=11 // pred_check
          %p168 = pneg %p82
        $region18: #{tpu_custom_call.1} parent=11 // pred_check_branch
          %170 = sbr.rel (%p168) target = $region20
        $region19: #{tpu_custom_call.1} parent=11 // pred_region
          _
        $region20: #{tpu_custom_call.1} parent=11 // pred_fallthru
          _
        // Predicated region
        $region21: #{tpu_custom_call.1} parent=11 // pred_check
          %p171 = pneg %p103
        $region22: #{tpu_custom_call.1} parent=11 // pred_check_branch
          %173 = sbr.rel (%p171) target = $region24
        $region23: #{tpu_custom_call.1} parent=11 // pred_region
          _
        $region24: #{tpu_custom_call.1} parent=11 // pred_fallthru
          _
        // Predicated region
        $region25: #{tpu_custom_call.1} parent=11 // pred_check
          %p174 = pneg %p124
        $region26: #{tpu_custom_call.1} parent=11 // pred_check_branch
          %176 = sbr.rel (%p174) target = $region28
        $region27: #{tpu_custom_call.1} parent=11 // pred_region
          _
        $region28: #{tpu_custom_call.1} parent=11 // pred_fallthru
          _
      $region12: #{tpu_custom_call.1} parent=5 // pred_fallthru
        _
      %p177 = scmp.lt.s32.totalorder %s14, 2
      // Predicated region
      $region29: #{tpu_custom_call.1} parent=5 // pred_check
        %p178 = pneg %p177
      $region30: #{tpu_custom_call.1} parent=5 // pred_check_branch
        %180 = sbr.rel (%p178) target = $region32
      $region31: #{tpu_custom_call.1} parent=5 // pred_region
        // Predicated region
        $region33: #{tpu_custom_call.1} parent=31 // pred_check
          %p181 = pneg %p34
        $region34: #{tpu_custom_call.1} parent=31 // pred_check_branch
          %183 = sbr.rel (%p181) target = $region36
        $region35: #{tpu_custom_call.1} parent=31 // pred_region
          %s184 = smul.u32 8, %s14
          %p185 = scmp.lt.s32.totalorder %s184, 15
          %s186 = scalar_select %p185, %s184, 15
          %s187 = smul.addr %s186, 3
          %s188 = smul.addr %s187, 4
          %s189 = scalar_lea.vmem %s0, %s188
          %s190 = smul.u32 8, %s14
        $region36: #{tpu_custom_call.1} parent=31 // pred_fallthru
          _
      $region32: #{tpu_custom_call.1} parent=5 // pred_fallthru
        _
      %p191 = scmp.le.s32.totalorder 1, %s14
      %p192 = scmp.lt.s32.totalorder %s14, 3
      %p193 = pnand %p191, %p192
      %p194 = pneg %p193
      // Predicated region
      $region37: #{tpu_custom_call.1} parent=5 // pred_check
        _
      $region38: #{tpu_custom_call.1} parent=5 // pred_check_branch
        %196 = sbr.rel (%p193) target = $region40
      $region39: #{tpu_custom_call.1} parent=5 // pred_region
        %s197 = ssub.s32 %s14, 1
        %s198 = smul.u32 8, %s19
        %p199 = scmp.lt.s32.totalorder %s198, 15
        %s200 = scalar_select %p199, %s198, 15
        %s201 = smul.addr %s200, 3
        %s202 = smul.addr %s201, 4
        %s203 = scalar_lea.vmem %s0, %s202
        %p204 = pneg %p40
        %p205 = pneg %p37
        %p206 = pneg %p61
        %p207 = pneg %p58
        %p208 = pneg %p82
        %p209 = pneg %p79
        %p210 = pneg %p103
        %p211 = pneg %p100
        %p212 = pneg %p124
        %p213 = pneg %p121
        %p214 = pneg %p150
        %p215 = pneg %p147
        %s216 = sand.u32 %s137, 1
        %s217 = scalar_lea.sflag [#allocation3], %s216
        %s218 = sand.u32 %s137, 1
        %s219 = smul.addr %s218, 8
        %s220 = scalar_lea.vmem [#allocation2], %s219
        %s221 = smul.u32 8, %s19
        %p222 = scmp.lt.s32.totalorder %s221, 15
        %s223 = scalar_select %p222, %s221, 15
        %s224 = smul.addr %s223, 3
        %s225 = smul.addr %s224, 4
        %s226 = scalar_lea.vmem %s0, %s225
        %s227 = smul.u32 8, %s19
        %v229 = vld [vmem:[%s226] sm:$0xf]
        %v230 = vld [vmem:[%s226 + $0x4] sm:$0xf]
        %v231 = vld [vmem:[%s226 + $0x8] sm:$0x3]
        %v232 = vld [vmem:[%s226 + $0xc] sm:$0xf]
        %v233 = vld [vmem:[%s226 + $0x10] sm:$0xf]
        %v234 = vld [vmem:[%s226 + $0x14] sm:$0x3]
        %v235 = vld [vmem:[%s226 + $0x18] sm:$0xf]
        %v236 = vld [vmem:[%s226 + $0x1c] sm:$0xf]
        %v237 = vld [vmem:[%s226 + $0x20] sm:$0x3]
        %v238 = vld [vmem:[%s226 + $0x24] sm:$0xf]
        %v239 = vld [vmem:[%s226 + $0x28] sm:$0xf]
        %v240 = vld [vmem:[%s226 + $0x2c] sm:$0x3]
        %v241 = vld [vmem:[%s226 + $0x30] sm:$0xf]
        %v242 = vld [vmem:[%s226 + $0x34] sm:$0xf]
        %v243 = vld [vmem:[%s226 + $0x38] sm:$0x3]
        %v244 = vld [vmem:[%s226 + $0x3c] sm:$0xf]
        %v245 = vld [vmem:[%s226 + $0x40] sm:$0xf]
        %v246 = vld [vmem:[%s226 + $0x44] sm:$0x3]
        %v247 = vld [vmem:[%s226 + $0x48] sm:$0xf]
        %v248 = vld [vmem:[%s226 + $0x4c] sm:$0xf]
        %v249 = vld [vmem:[%s226 + $0x50] sm:$0x3]
        %v250 = vld [vmem:[%s226 + $0x54] sm:$0xf]
        %v251 = vld [vmem:[%s226 + $0x58] sm:$0xf]
        %v252 = vld [vmem:[%s226 + $0x5c] sm:$0x3]
        %v269 = vunpack.c.l.b16 %v229
        %v270 = vunpack.c.l.b16 %v230
        %v271 = vunpack.c.l.b16 %v232
        %v272 = vunpack.c.l.b16 %v233
        %v273 = vunpack.c.l.b16 %v235
        %v274 = vunpack.c.l.b16 %v236
        %v275 = vunpack.c.l.b16 %v238
        %v276 = vunpack.c.l.b16 %v239
        %v277 = vunpack.c.l.b16 %v241
        %v278 = vunpack.c.l.b16 %v242
        %v279 = vunpack.c.l.b16 %v244
        %v280 = vunpack.c.l.b16 %v245
        %v281 = vunpack.c.l.b16 %v247
        %v282 = vunpack.c.l.b16 %v248
        %v283 = vunpack.c.l.b16 %v250
        %v284 = vunpack.c.l.b16 %v251
        %v285 = vpack.c.b16 %v270, %v269
        %v286 = vpack.c.b16 %v272, %v271
        %v287 = vpack.c.b16 %v274, %v273
        %v288 = vpack.c.b16 %v276, %v275
        %v289 = vpack.c.b16 %v278, %v277
        %v290 = vpack.c.b16 %v280, %v279
        %v291 = vpack.c.b16 %v282, %v281
        %v292 = vpack.c.b16 %v284, %v283
        %v301 = vunpack.c.l.b16 %v231
        %v302 = vunpack.c.l.b16 %v234
        %v303 = vunpack.c.l.b16 %v237
        %v304 = vunpack.c.l.b16 %v240
        %v305 = vunpack.c.l.b16 %v243
        %v306 = vunpack.c.l.b16 %v246
        %v307 = vunpack.c.l.b16 %v249
        %v308 = vunpack.c.l.b16 %v252
        %v309 = vpack.c.b16 %v301, %v301
        %v310 = vpack.c.b16 %v302, %v302
        %v311 = vpack.c.b16 %v303, %v303
        %v312 = vpack.c.b16 %v304, %v304
        %v313 = vpack.c.b16 %v305, %v305
        %v314 = vpack.c.b16 %v306, %v306
        %v315 = vpack.c.b16 %v307, %v307
        %v316 = vpack.c.b16 %v308, %v308
        %vm317 = vsmask.f32 7424
        %v319 = vshrl.u32 %v285, 16
        %v321 = vshll.u32 %v285, 16
        %v323 = vrot.slane %v321, 1
        %v324 = vor.u32 %v319, %v323
        %v326 = vshll.u32 %v309, 16
        %v328 = vrot.slane %v326, 1
        %v329 = vsel %vm317, %v324, %v328
        %v331 = vshrl.u32 %v286, 16
        %v333 = vshll.u32 %v286, 16
        %v335 = vrot.slane %v333, 1
        %v336 = vor.u32 %v331, %v335
        %v338 = vshll.u32 %v310, 16
        %v340 = vrot.slane %v338, 1
        %v341 = vsel %vm317, %v336, %v340
        %v343 = vshrl.u32 %v287, 16
        %v345 = vshll.u32 %v287, 16
        %v347 = vrot.slane %v345, 1
        %v348 = vor.u32 %v343, %v347
        %v350 = vshll.u32 %v311, 16
        %v352 = vrot.slane %v350, 1
        %v353 = vsel %vm317, %v348, %v352
        %v355 = vshrl.u32 %v288, 16
        %v357 = vshll.u32 %v288, 16
        %v359 = vrot.slane %v357, 1
        %v360 = vor.u32 %v355, %v359
        %v362 = vshll.u32 %v312, 16
        %v364 = vrot.slane %v362, 1
        %v365 = vsel %vm317, %v360, %v364
        %v367 = vshrl.u32 %v289, 16
        %v369 = vshll.u32 %v289, 16
        %v371 = vrot.slane %v369, 1
        %v372 = vor.u32 %v367, %v371
        %v374 = vshll.u32 %v313, 16
        %v376 = vrot.slane %v374, 1
        %v377 = vsel %vm317, %v372, %v376
        %v379 = vshrl.u32 %v290, 16
        %v381 = vshll.u32 %v290, 16
        %v383 = vrot.slane %v381, 1
        %v384 = vor.u32 %v379, %v383
        %v386 = vshll.u32 %v314, 16
        %v388 = vrot.slane %v386, 1
        %v389 = vsel %vm317, %v384, %v388
        %v391 = vshrl.u32 %v291, 16
        %v393 = vshll.u32 %v291, 16
        %v395 = vrot.slane %v393, 1
        %v396 = vor.u32 %v391, %v395
        %v398 = vshll.u32 %v315, 16
        %v400 = vrot.slane %v398, 1
        %v401 = vsel %vm317, %v396, %v400
        %v403 = vshrl.u32 %v292, 16
        %v405 = vshll.u32 %v292, 16
        %v407 = vrot.slane %v405, 1
        %v408 = vor.u32 %v403, %v407
        %v410 = vshll.u32 %v316, 16
        %v412 = vrot.slane %v410, 1
        %v413 = vsel %vm317, %v408, %v412
        %414 = vrot.lane.b32.xlu0 %v329, 32
        %v415 = vpop.permute.xlu0 %414
        %416 = vrot.lane.b32.xlu0 %v341, 32
        %v417 = vpop.permute.xlu0 %416
        %418 = vrot.lane.b32.xlu0 %v353, 32
        %v419 = vpop.permute.xlu0 %418
        %420 = vrot.lane.b32.xlu0 %v365, 32
        %v421 = vpop.permute.xlu0 %420
        %422 = vrot.lane.b32.xlu0 %v377, 32
        %v423 = vpop.permute.xlu0 %422
        %424 = vrot.lane.b32.xlu0 %v389, 32
        %v425 = vpop.permute.xlu0 %424
        %426 = vrot.lane.b32.xlu0 %v401, 32
        %v427 = vpop.permute.xlu0 %426
        %428 = vrot.lane.b32.xlu0 %v413, 32
        %v429 = vpop.permute.xlu0 %428
        %vm430 = vcmask 1046528
        %v431 = vrot.slane %v285, 1
        %v432 = vrot.slane %v309, 1
        %v433 = vsel %vm430, %v431, %v432
        %v434 = vrot.slane %v286, 1
        %v435 = vrot.slane %v310, 1
        %v436 = vsel %vm430, %v434, %v435
        %v437 = vrot.slane %v287, 1
        %v438 = vrot.slane %v311, 1
        %v439 = vsel %vm430, %v437, %v438
        %v440 = vrot.slane %v288, 1
        %v441 = vrot.slane %v312, 1
        %v442 = vsel %vm430, %v440, %v441
        %v443 = vrot.slane %v289, 1
        %v444 = vrot.slane %v313, 1
        %v445 = vsel %vm430, %v443, %v444
        %v446 = vrot.slane %v290, 1
        %v447 = vrot.slane %v314, 1
        %v448 = vsel %vm430, %v446, %v447
        %v449 = vrot.slane %v291, 1
        %v450 = vrot.slane %v315, 1
        %v451 = vsel %vm430, %v449, %v450
        %v452 = vrot.slane %v292, 1
        %v453 = vrot.slane %v316, 1
        %v454 = vsel %vm430, %v452, %v453
        %455 = vrot.lane.b32.xlu0 %v433, 64
        %v456 = vpop.permute.xlu0 %455
        %457 = vrot.lane.b32.xlu0 %v436, 64
        %v458 = vpop.permute.xlu0 %457
        %459 = vrot.lane.b32.xlu0 %v439, 64
        %v460 = vpop.permute.xlu0 %459
        %461 = vrot.lane.b32.xlu0 %v442, 64
        %v462 = vpop.permute.xlu0 %461
        %463 = vrot.lane.b32.xlu0 %v445, 64
        %v464 = vpop.permute.xlu0 %463
        %465 = vrot.lane.b32.xlu0 %v448, 64
        %v466 = vpop.permute.xlu0 %465
        %467 = vrot.lane.b32.xlu0 %v451, 64
        %v468 = vpop.permute.xlu0 %467
        %469 = vrot.lane.b32.xlu0 %v454, 64
        %v470 = vpop.permute.xlu0 %469
        %vm471 = vsmask.f32 6400
        %v472 = vrot.slane %v319, 1
        %v473 = vrot.slane %v321, 2
        %v474 = vor.u32 %v472, %v473
        %v475 = vshrl.u32 %v309, 16
        %v477 = vrot.slane %v475, 1
        %v478 = vrot.slane %v326, 2
        %v479 = vor.u32 %v477, %v478
        %v480 = vsel %vm471, %v474, %v479
        %v481 = vrot.slane %v331, 1
        %v482 = vrot.slane %v333, 2
        %v483 = vor.u32 %v481, %v482
        %v484 = vshrl.u32 %v310, 16
        %v486 = vrot.slane %v484, 1
        %v487 = vrot.slane %v338, 2
        %v488 = vor.u32 %v486, %v487
        %v489 = vsel %vm471, %v483, %v488
        %v490 = vrot.slane %v343, 1
        %v491 = vrot.slane %v345, 2
        %v492 = vor.u32 %v490, %v491
        %v493 = vshrl.u32 %v311, 16
        %v495 = vrot.slane %v493, 1
        %v496 = vrot.slane %v350, 2
        %v497 = vor.u32 %v495, %v496
        %v498 = vsel %vm471, %v492, %v497
        %v499 = vrot.slane %v355, 1
        %v500 = vrot.slane %v357, 2
        %v501 = vor.u32 %v499, %v500
        %v502 = vshrl.u32 %v312, 16
        %v504 = vrot.slane %v502, 1
        %v505 = vrot.slane %v362, 2
        %v506 = vor.u32 %v504, %v505
        %v507 = vsel %vm471, %v501, %v506
        %v508 = vrot.slane %v367, 1
        %v509 = vrot.slane %v369, 2
        %v510 = vor.u32 %v508, %v509
        %v511 = vshrl.u32 %v313, 16
        %v513 = vrot.slane %v511, 1
        %v514 = vrot.slane %v374, 2
        %v515 = vor.u32 %v513, %v514
        %v516 = vsel %vm471, %v510, %v515
        %v517 = vrot.slane %v379, 1
        %v518 = vrot.slane %v381, 2
        %v519 = vor.u32 %v517, %v518
        %v520 = vshrl.u32 %v314, 16
        %v522 = vrot.slane %v520, 1
        %v523 = vrot.slane %v386, 2
        %v524 = vor.u32 %v522, %v523
        %v525 = vsel %vm471, %v519, %v524
        %v526 = vrot.slane %v391, 1
        %v527 = vrot.slane %v393, 2
        %v528 = vor.u32 %v526, %v527
        %v529 = vshrl.u32 %v315, 16
        %v531 = vrot.slane %v529, 1
        %v532 = vrot.slane %v398, 2
        %v533 = vor.u32 %v531, %v532
        %v534 = vsel %vm471, %v528, %v533
        %v535 = vrot.slane %v403, 1
        %v536 = vrot.slane %v405, 2
        %v537 = vor.u32 %v535, %v536
        %v538 = vshrl.u32 %v316, 16
        %v540 = vrot.slane %v538, 1
        %v541 = vrot.slane %v410, 2
        %v542 = vor.u32 %v540, %v541
        %v543 = vsel %vm471, %v537, %v542
        %544 = vrot.lane.b32.xlu0 %v480, 96
        %v545 = vpop.permute.xlu0 %544
        %546 = vrot.lane.b32.xlu0 %v489, 96
        %v547 = vpop.permute.xlu0 %546
        %548 = vrot.lane.b32.xlu0 %v498, 96
        %v549 = vpop.permute.xlu0 %548
        %550 = vrot.lane.b32.xlu0 %v507, 96
        %v551 = vpop.permute.xlu0 %550
        %552 = vrot.lane.b32.xlu0 %v516, 96
        %v553 = vpop.permute.xlu0 %552
        %554 = vrot.lane.b32.xlu0 %v525, 96
        %v555 = vpop.permute.xlu0 %554
        %556 = vrot.lane.b32.xlu0 %v534, 96
        %v557 = vpop.permute.xlu0 %556
        %558 = vrot.lane.b32.xlu0 %v543, 96
        %v559 = vpop.permute.xlu0 %558
        %vm560 = vcmask 261120
        %v562 = vsel %vm560, %v285, %v415
        %v564 = vsel %vm560, %v286, %v417
        %v566 = vsel %vm560, %v287, %v419
        %v568 = vsel %vm560, %v288, %v421
        %v570 = vsel %vm560, %v289, %v423
        %v572 = vsel %vm560, %v290, %v425
        %v574 = vsel %vm560, %v291, %v427
        %v576 = vsel %vm560, %v292, %v429
        %vm577 = vcmask 523264
        %v579 = vsel %vm577, %v562, %v456
        %v581 = vsel %vm577, %v564, %v458
        %v583 = vsel %vm577, %v566, %v460
        %v585 = vsel %vm577, %v568, %v462
        %v587 = vsel %vm577, %v570, %v464
        %v589 = vsel %vm577, %v572, %v466
        %v591 = vsel %vm577, %v574, %v468
        %v593 = vsel %vm577, %v576, %v470
        %vm594 = vcmask 785408
        %v596 = vsel %vm594, %v579, %v545
        %v599 = vsel %vm594, %v581, %v547
        %v602 = vsel %vm594, %v583, %v549
        %v605 = vsel %vm594, %v585, %v551
        %v608 = vsel %vm594, %v587, %v553
        %v611 = vsel %vm594, %v589, %v555
        %v614 = vsel %vm594, %v591, %v557
        %v617 = vsel %vm594, %v593, %v559
        %v619 = vld [vmem:[%s1] sm:$0xf]
        %v620 = vld [vmem:[%s1 + $0x4] sm:$0xf]
        %v621 = vld [vmem:[%s1 + $0x8] sm:$0xf]
        %v622 = vld [vmem:[%s1 + $0xc] sm:$0xf]
        %v623 = vld [vmem:[%s1 + $0x10] sm:$0xf]
        %v624 = vld [vmem:[%s1 + $0x14] sm:$0xf]
        %v625 = vld [vmem:[%s1 + $0x18] sm:$0xf]
        %v626 = vld [vmem:[%s1 + $0x1c] sm:$0xf]
        %v627 = vld [vmem:[%s1 + $0x20] sm:$0xf]
        %v628 = vld [vmem:[%s1 + $0x24] sm:$0xf]
        %v629 = vld [vmem:[%s1 + $0x28] sm:$0xf]
        %v630 = vld [vmem:[%s1 + $0x2c] sm:$0xf]
        %v631 = vld [vmem:[%s1 + $0x30] sm:$0xf]
        %v632 = vld [vmem:[%s1 + $0x34] sm:$0xf]
        %v633 = vld [vmem:[%s1 + $0x38] sm:$0xf]
        %v634 = vld [vmem:[%s1 + $0x3c] sm:$0xf]
        %v651 = vunpack.c.l.b16 %v619
        %v652 = vunpack.c.l.b16 %v620
        %v653 = vunpack.c.l.b16 %v621
        %v654 = vunpack.c.l.b16 %v622
        %v655 = vunpack.c.l.b16 %v623
        %v656 = vunpack.c.l.b16 %v624
        %v657 = vunpack.c.l.b16 %v625
        %v658 = vunpack.c.l.b16 %v626
        %v659 = vunpack.c.l.b16 %v627
        %v660 = vunpack.c.l.b16 %v628
        %v661 = vunpack.c.l.b16 %v629
        %v662 = vunpack.c.l.b16 %v630
        %v663 = vunpack.c.l.b16 %v631
        %v664 = vunpack.c.l.b16 %v632
        %v665 = vunpack.c.l.b16 %v633
        %v666 = vunpack.c.l.b16 %v634
        %v667 = vpack.c.b16 %v652, %v651
        %v668 = vpack.c.b16 %v654, %v653
        %v669 = vpack.c.b16 %v656, %v655
        %v670 = vpack.c.b16 %v658, %v657
        %v671 = vpack.c.b16 %v660, %v659
        %v672 = vpack.c.b16 %v662, %v661
        %v673 = vpack.c.b16 %v664, %v663
        %v674 = vpack.c.b16 %v666, %v665
        %683 = vmatprep.subr.bf16.mxu0 0
        %684 = vmatpush1.bf16.msra.mxu0 %v674
        %685 = vmatprep.subr.bf16.mxu0 0
        %686 = vmatpush1.bf16.msra.mxu0 %v673
        %687 = vmatprep.subr.bf16.mxu0 0
        %688 = vmatpush1.bf16.msra.mxu0 %v672
        %689 = vmatprep.subr.bf16.mxu0 0
        %690 = vmatpush1.bf16.msra.mxu0 %v671
        %691 = vmatprep.subr.bf16.mxu0 0
        %692 = vmatpush1.bf16.msra.mxu0 %v670
        %693 = vmatprep.subr.bf16.mxu0 0
        %694 = vmatpush1.bf16.msra.mxu0 %v669
        %695 = vmatprep.subr.bf16.mxu0 0
        %696 = vmatpush1.bf16.msra.mxu0 %v668
        %697 = vmatprep.subr.bf16.mxu0 0
        %698 = vmatpush1.bf16.msra.mxu0 %v667
        %699 = vmatprep.subr.bf16.mxu0 0
        %700 = vmatpush2.bf16.msra.mxu0 0
        %701 = vmatprep.subr.bf16.mxu0 0
        %702 = vmatpush2.bf16.msra.mxu0 0
        %703 = vmatprep.subr.bf16.mxu0 0
        %704 = vmatpush2.bf16.msra.mxu0 0
        %705 = vmatprep.subr.bf16.mxu0 0
        %706 = vmatpush2.bf16.msra.mxu0 0
        %707 = vmatprep.subr.bf16.mxu0 0
        %708 = vmatpush2.bf16.msra.mxu0 0
        %709 = vmatprep.subr.bf16.mxu0 0
        %710 = vmatpush2.bf16.msra.mxu0 0
        %711 = vmatprep.subr.bf16.mxu0 0
        %712 = vmatpush2.bf16.msra.mxu0 0
        %713 = vmatprep.subr.bf16.mxu0 0
        %714 = vmatpush2.bf16.msra.mxu0 0
        %715 = vmatprep.mubr.bf16.mxu0 0
        %716 = vmatmul.mubr.bf16.gmra.mxu0 %v596
        %v717 = vpop.f32.mrf.mxu0
        %v718 = vadd.f32 0.0, %v717
        %v719 = vpop.f32.mrf.mxu0
        %v720 = vpop.f32.mrf.mxu0
        %v721 = vadd.f32 0.0, %v720
        %v722 = vpop.f32.mrf.mxu0
        %723 = vmatprep.mubr.bf16.mxu0 0
        %724 = vmatmul.mubr.bf16.gmra.mxu0 %v599
        %v725 = vpop.f32.mrf.mxu0
        %v726 = vadd.f32 0.0, %v725
        %v727 = vpop.f32.mrf.mxu0
        %v728 = vpop.f32.mrf.mxu0
        %v729 = vadd.f32 0.0, %v728
        %v730 = vpop.f32.mrf.mxu0
        %731 = vmatprep.mubr.bf16.mxu0 0
        %732 = vmatmul.mubr.bf16.gmra.mxu0 %v602
        %v733 = vpop.f32.mrf.mxu0
        %v734 = vadd.f32 0.0, %v733
        %v735 = vpop.f32.mrf.mxu0
        %v736 = vpop.f32.mrf.mxu0
        %v737 = vadd.f32 0.0, %v736
        %v738 = vpop.f32.mrf.mxu0
        %739 = vmatprep.mubr.bf16.mxu0 0
        %740 = vmatmul.mubr.bf16.gmra.mxu0 %v605
        %v741 = vpop.f32.mrf.mxu0
        %v742 = vadd.f32 0.0, %v741
        %v743 = vpop.f32.mrf.mxu0
        %v744 = vpop.f32.mrf.mxu0
        %v745 = vadd.f32 0.0, %v744
        %v746 = vpop.f32.mrf.mxu0
        %747 = vmatprep.mubr.bf16.mxu0 0
        %748 = vmatmul.mubr.bf16.gmra.mxu0 %v608
        %v749 = vpop.f32.mrf.mxu0
        %v750 = vadd.f32 0.0, %v749
        %v751 = vpop.f32.mrf.mxu0
        %v752 = vpop.f32.mrf.mxu0
        %v753 = vadd.f32 0.0, %v752
        %v754 = vpop.f32.mrf.mxu0
        %755 = vmatprep.mubr.bf16.mxu0 0
        %756 = vmatmul.mubr.bf16.gmra.mxu0 %v611
        %v757 = vpop.f32.mrf.mxu0
        %v758 = vadd.f32 0.0, %v757
        %v759 = vpop.f32.mrf.mxu0
        %v760 = vpop.f32.mrf.mxu0
        %v761 = vadd.f32 0.0, %v760
        %v762 = vpop.f32.mrf.mxu0
        %763 = vmatprep.mubr.bf16.mxu0 0
        %764 = vmatmul.mubr.bf16.gmra.mxu0 %v614
        %v765 = vpop.f32.mrf.mxu0
        %v766 = vadd.f32 0.0, %v765
        %v767 = vpop.f32.mrf.mxu0
        %v768 = vpop.f32.mrf.mxu0
        %v769 = vadd.f32 0.0, %v768
        %v770 = vpop.f32.mrf.mxu0
        %771 = vmatprep.mubr.bf16.mxu0 0
        %772 = vmatmul.mubr.bf16.gmra.mxu0 %v617
        %v773 = vpop.f32.mrf.mxu0
        %v774 = vadd.f32 0.0, %v773
        %v775 = vpop.f32.mrf.mxu0
        %v776 = vpop.f32.mrf.mxu0
        %v777 = vadd.f32 0.0, %v776
        %v778 = vpop.f32.mrf.mxu0
        %779 = vdwg.mxu0
        %v780 = vld [vmem:[%s2] sm:$0xff]
        %v781 = vld [vmem:[%s2 + $0x8] sm:$0xff]
        %v782 = vadd.f32 %v718, %v780
        %v783 = vadd.f32 %v721, %v781
        %v784 = vadd.f32 %v726, %v780
        %v785 = vadd.f32 %v729, %v781
        %v786 = vadd.f32 %v734, %v780
        %v787 = vadd.f32 %v737, %v781
        %v788 = vadd.f32 %v742, %v780
        %v789 = vadd.f32 %v745, %v781
        %v790 = vadd.f32 %v750, %v780
        %v791 = vadd.f32 %v753, %v781
        %v792 = vadd.f32 %v758, %v780
        %v793 = vadd.f32 %v761, %v781
        %v794 = vadd.f32 %v766, %v780
        %v795 = vadd.f32 %v769, %v781
        %v796 = vadd.f32 %v774, %v780
        %v797 = vadd.f32 %v777, %v781
        %v798 = vmax.f32 %v782, 0.0
        %v799 = vmax.f32 %v783, 0.0
        %v800 = vmax.f32 %v784, 0.0
        %v801 = vmax.f32 %v785, 0.0
        %v802 = vmax.f32 %v786, 0.0
        %v803 = vmax.f32 %v787, 0.0
        %v804 = vmax.f32 %v788, 0.0
        %v805 = vmax.f32 %v789, 0.0
        %v806 = vmax.f32 %v790, 0.0
        %v807 = vmax.f32 %v791, 0.0
        %v808 = vmax.f32 %v792, 0.0
        %v809 = vmax.f32 %v793, 0.0
        %v810 = vmax.f32 %v794, 0.0
        %v811 = vmax.f32 %v795, 0.0
        %v812 = vmax.f32 %v796, 0.0
        %v813 = vmax.f32 %v797, 0.0
        %v814 = vmax.f32 %v798, %v799
        %v815 = vrot.slane %v814, 4
        %v816 = vmax.f32 %v814, %v815
        %v817 = vrot.slane %v816, 2
        %v818 = vmax.f32 %v816, %v817
        %v819 = vrot.slane %v818, 1
        %v820 = vmax.f32 %v818, %v819
        %v821 = vmax.f32 %v800, %v801
        %v822 = vrot.slane %v821, 4
        %v823 = vmax.f32 %v821, %v822
        %v824 = vrot.slane %v823, 2
        %v825 = vmax.f32 %v823, %v824
        %v826 = vrot.slane %v825, 1
        %v827 = vmax.f32 %v825, %v826
        %v828 = vmax.f32 %v802, %v803
        %v829 = vrot.slane %v828, 4
        %v830 = vmax.f32 %v828, %v829
        %v831 = vrot.slane %v830, 2
        %v832 = vmax.f32 %v830, %v831
        %v833 = vrot.slane %v832, 1
        %v834 = vmax.f32 %v832, %v833
        %v835 = vmax.f32 %v804, %v805
        %v836 = vrot.slane %v835, 4
        %v837 = vmax.f32 %v835, %v836
        %v838 = vrot.slane %v837, 2
        %v839 = vmax.f32 %v837, %v838
        %v840 = vrot.slane %v839, 1
        %v841 = vmax.f32 %v839, %v840
        %v842 = vmax.f32 %v806, %v807
        %v843 = vrot.slane %v842, 4
        %v844 = vmax.f32 %v842, %v843
        %v845 = vrot.slane %v844, 2
        %v846 = vmax.f32 %v844, %v845
        %v847 = vrot.slane %v846, 1
        %v848 = vmax.f32 %v846, %v847
        %v849 = vmax.f32 %v808, %v809
        %v850 = vrot.slane %v849, 4
        %v851 = vmax.f32 %v849, %v850
        %v852 = vrot.slane %v851, 2
        %v853 = vmax.f32 %v851, %v852
        %v854 = vrot.slane %v853, 1
        %v855 = vmax.f32 %v853, %v854
        %v856 = vmax.f32 %v810, %v811
        %v857 = vrot.slane %v856, 4
        %v858 = vmax.f32 %v856, %v857
        %v859 = vrot.slane %v858, 2
        %v860 = vmax.f32 %v858, %v859
        %v861 = vrot.slane %v860, 1
        %v862 = vmax.f32 %v860, %v861
        %v863 = vmax.f32 %v812, %v813
        %v864 = vrot.slane %v863, 4
        %v865 = vmax.f32 %v863, %v864
        %v866 = vrot.slane %v865, 2
        %v867 = vmax.f32 %v865, %v866
        %v868 = vrot.slane %v867, 1
        %v869 = vmax.f32 %v867, %v868
        %v870 = vpack.c.bf16 %v820, %v820
        %v871 = vpack.c.bf16 %v827, %v827
        %v872 = vpack.c.bf16 %v834, %v834
        %v873 = vpack.c.bf16 %v841, %v841
        %v874 = vpack.c.bf16 %v848, %v848
        %v875 = vpack.c.bf16 %v855, %v855
        %v876 = vpack.c.bf16 %v862, %v862
        %v877 = vpack.c.bf16 %v869, %v869
        %v878 = vld [vmem:[%s3] sm:$0xf]
        %v879 = vld [vmem:[%s3 + $0x4] sm:$0xf]
        %v880 = vld [vmem:[%s3 + $0x8] sm:$0xf]
        %v881 = vld [vmem:[%s3 + $0xc] sm:$0xf]
        %v882 = vld [vmem:[%s3 + $0x10] sm:$0xf]
        %v883 = vld [vmem:[%s3 + $0x14] sm:$0xf]
        %v884 = vld [vmem:[%s3 + $0x18] sm:$0xf]
        %v885 = vld [vmem:[%s3 + $0x1c] sm:$0xf]
        %v886 = vld [vmem:[%s3 + $0x20] sm:$0xf]
        %v887 = vld [vmem:[%s3 + $0x24] sm:$0xf]
        %v888 = vld [vmem:[%s3 + $0x28] sm:$0xf]
        %v889 = vld [vmem:[%s3 + $0x2c] sm:$0xf]
        %v890 = vld [vmem:[%s3 + $0x30] sm:$0xf]
        %v891 = vld [vmem:[%s3 + $0x34] sm:$0xf]
        %v892 = vld [vmem:[%s3 + $0x38] sm:$0xf]
        %v893 = vld [vmem:[%s3 + $0x3c] sm:$0xf]
        %v894 = vld [vmem:[%s4] sm:$0x1]
        %v896 = vlaneseq
        %v897 = vshrl.u32 %v896, 7
        %v898 = vsub.s32 0, %v897
        %v899 = vrot.slane %v894, %v898
        %v909 = vunpack.c.l.b16 %v870
        %v910 = vunpack.c.l.b16 %v871
        %v911 = vunpack.c.l.b16 %v872
        %v912 = vunpack.c.l.b16 %v873
        %v913 = vunpack.c.l.b16 %v874
        %v914 = vunpack.c.l.b16 %v875
        %v915 = vunpack.c.l.b16 %v876
        %v916 = vunpack.c.l.b16 %v877
        %vm917 = vcmask 1041409
        %v918 = vsel %vm917, %v910, %v909
        %vm919 = vcmask 1042434
        %v920 = vsel %vm919, %v911, %v918
        %vm921 = vcmask 1043459
        %v922 = vsel %vm921, %v912, %v920
        %vm923 = vcmask 1044484
        %v924 = vsel %vm923, %v913, %v922
        %vm925 = vcmask 1045509
        %v926 = vsel %vm925, %v914, %v924
        %vm927 = vcmask 1046534
        %v928 = vsel %vm927, %v915, %v926
        %vm929 = vcmask 1047559
        %v930 = vsel %vm929, %v916, %v928
        %v931 = vpack.c.b16 %v930, %v930
        %v949 = vunpack.c.l.b16 %v878
        %v950 = vunpack.c.l.b16 %v879
        %v951 = vunpack.c.l.b16 %v880
        %v952 = vunpack.c.l.b16 %v881
        %v953 = vunpack.c.l.b16 %v882
        %v954 = vunpack.c.l.b16 %v883
        %v955 = vunpack.c.l.b16 %v884
        %v956 = vunpack.c.l.b16 %v885
        %v957 = vunpack.c.l.b16 %v886
        %v958 = vunpack.c.l.b16 %v887
        %v959 = vunpack.c.l.b16 %v888
        %v960 = vunpack.c.l.b16 %v889
        %v961 = vunpack.c.l.b16 %v890
        %v962 = vunpack.c.l.b16 %v891
        %v963 = vunpack.c.l.b16 %v892
        %v964 = vunpack.c.l.b16 %v893
        %v965 = vpack.c.b16 %v950, %v949
        %v966 = vpack.c.b16 %v952, %v951
        %v967 = vpack.c.b16 %v954, %v953
        %v968 = vpack.c.b16 %v956, %v955
        %v969 = vpack.c.b16 %v958, %v957
        %v970 = vpack.c.b16 %v960, %v959
        %v971 = vpack.c.b16 %v962, %v961
        %v972 = vpack.c.b16 %v964, %v963
        %981 = vmatprep.subr.bf16.mxu0 0
        %982 = vmatpush1.bf16.msra.mxu0 %v972
        %983 = vmatprep.subr.bf16.mxu0 0
        %984 = vmatpush1.bf16.msra.mxu0 %v971
        %985 = vmatprep.subr.bf16.mxu0 0
        %986 = vmatpush1.bf16.msra.mxu0 %v970
        %987 = vmatprep.subr.bf16.mxu0 0
        %988 = vmatpush1.bf16.msra.mxu0 %v969
        %989 = vmatprep.subr.bf16.mxu0 0
        %990 = vmatpush1.bf16.msra.mxu0 %v968
        %991 = vmatprep.subr.bf16.mxu0 0
        %992 = vmatpush1.bf16.msra.mxu0 %v967
        %993 = vmatprep.subr.bf16.mxu0 0
        %994 = vmatpush1.bf16.msra.mxu0 %v966
        %995 = vmatprep.subr.bf16.mxu0 0
        %996 = vmatpush1.bf16.msra.mxu0 %v965
        %997 = vmatprep.subr.bf16.mxu0 0
        %998 = vmatpush2.bf16.msra.mxu0 0
        %999 = vmatprep.subr.bf16.mxu0 0
        %1000 = vmatpush2.bf16.msra.mxu0 0
        %1001 = vmatprep.subr.bf16.mxu0 0
        %1002 = vmatpush2.bf16.msra.mxu0 0
        %1003 = vmatprep.subr.bf16.mxu0 0
        %1004 = vmatpush2.bf16.msra.mxu0 0
        %1005 = vmatprep.subr.bf16.mxu0 0
        %1006 = vmatpush2.bf16.msra.mxu0 0
        %1007 = vmatprep.subr.bf16.mxu0 0
        %1008 = vmatpush2.bf16.msra.mxu0 0
        %1009 = vmatprep.subr.bf16.mxu0 0
        %1010 = vmatpush2.bf16.msra.mxu0 0
        %1011 = vmatprep.subr.bf16.mxu0 0
        %1012 = vmatpush2.bf16.msra.mxu0 0
        %1013 = vmatprep.mubr.bf16.mxu0 0
        %1014 = vmatmul.mubr.bf16.gmra.mxu0 %v931
        %v1015 = vpop.f32.mrf.mxu0
        %v1016 = vadd.f32 %v899, %v1015
        %v1017 = vpop.f32.mrf.mxu0
        %v1018 = vpop.f32.mrf.mxu0
        %v1019 = vpop.f32.mrf.mxu0
        %1020 = vdwg.mxu0
        %1021 = vst [vmem:[%s220] sm:$0xff] %v1016
        %s1022 = sand.u32 %s137, 1
        %s1023 = scalar_lea.sflag [#allocation3], %s1022
        %s1024 = sand.u32 %s137, 1
        %s1025 = smul.addr %s1024, 8
        %s1026 = scalar_lea.vmem [#allocation2], %s1025
        // Predicated region
        $region41: #{tpu_custom_call.1} parent=39 // pred_check
          %p1027 = pneg %p147
        $region42: #{tpu_custom_call.1} parent=39 // pred_check_branch
          %1029 = sbr.rel (%p1027) target = $region44
        $region43: #{tpu_custom_call.1} parent=39 // pred_region
          %s1031 = ssub.s32 128, 128
          %1032 = vsyncadd %s1023, %s1031
          %s1033 = smul.addr %s19, 128
          %s1034 = scalar_lea.hbm %s5, %s1033
          %s1036 = sshll.u32 %s1026, 4
          %s1037 = int_to_ptr.vmem [resolvable:$true] %s1036
          %1039 = dma.vmem_to_hbm [thread:$0]  %s1037, 128, %s1034, %s1023
        $region44: #{tpu_custom_call.1} parent=39 // pred_fallthru
          _
      $region40: #{tpu_custom_call.1} parent=5 // pred_fallthru
        _
      %p1040 = scmp.le.s32.totalorder 2, %s14
      // Predicated region
      $region45: #{tpu_custom_call.1} parent=5 // pred_check
        %p1041 = pneg %p1040
      $region46: #{tpu_custom_call.1} parent=5 // pred_check_branch
        %1043 = sbr.rel (%p1041) target = $region48
      $region47: #{tpu_custom_call.1} parent=5 // pred_region
        %s1044 = ssub.s32 %s14, 2
        // Predicated region
        $region49: #{tpu_custom_call.1} parent=47 // pred_check
          %p1045 = pneg %p153
        $region50: #{tpu_custom_call.1} parent=47 // pred_check_branch
          %1047 = sbr.rel (%p1045) target = $region52
        $region51: #{tpu_custom_call.1} parent=47 // pred_region
          %s1048 = sand.u32 %s138, 1
          %s1049 = scalar_lea.sflag [#allocation3], %s1048
          %s1050 = sand.u32 %s138, 1
          %s1051 = smul.addr %s1050, 8
          %s1052 = scalar_lea.vmem [#allocation2], %s1051
          %1053 = dma.done %s1049, 128
        $region52: #{tpu_custom_call.1} parent=47 // pred_fallthru
          _
      $region48: #{tpu_custom_call.1} parent=5 // pred_fallthru
        _
    $region6: #{tpu_custom_call.1} parent=1 // loop_footer
      %s18 = sadd.s32 1, %s14
    $region7: #{tpu_custom_call.1} parent=1 // loop_footer_branch
      %13 = sbr.rel target = $region3
    $region8: #{tpu_custom_call.1} parent=1 // loop_exit
      _
    %1054 = vsyncpa [#allocation3], 1
    %s1055 = scalar_lea.sflag [#allocation3], 1
    %1056 = vsyncpa %s1055, 1

</llo_original>
